<compile_context>
chip_gen: v6e
topology: v6e:2x2x1
jax: 0.10.0
libtpu: 0.0.40
codegen_flags: <defaults>
</compile_context>

<pallas_src>
import math
import functools

import jax
import jax.numpy as jnp
from jax.experimental import pallas as pl
from jax.experimental.pallas import tpu as pltpu


def _fc_bias_single_k_kernel(x_ref, w_ref, b_ref, o_ref):
    """One (tm, tn) output tile, whole reduction in a single K tile (no scratch)."""
    acc = jnp.dot(x_ref[...], w_ref[...], preferred_element_type=jnp.float32)
    acc = acc + b_ref[...].astype(jnp.float32)  # (1, tn) broadcast over rows
    o_ref[...] = acc.astype(o_ref.dtype)


def _fc_bias_multi_k_kernel(x_ref, w_ref, b_ref, o_ref, acc_ref):
    """One (tm, tn) output tile, reducing over the K grid axis (innermost)."""
    k = pl.program_id(2)

    @pl.when(k == 0)
    def _():
        # Initialize the accumulator with the broadcast bias (saves the epilogue add).
        acc_ref[...] = jnp.broadcast_to(
            b_ref[...].astype(jnp.float32), acc_ref.shape
        )

    acc_ref[...] += jnp.dot(
        x_ref[...], w_ref[...], preferred_element_type=jnp.float32
    )

    @pl.when(k == pl.num_programs(2) - 1)
    def _():
        o_ref[...] = acc_ref[...].astype(o_ref.dtype)


def _round_up(a, b):
    return (a + b - 1) // b * b


def _sublane_min(dtype):
    # f32 -> 8, bf16/fp16 -> 16, int8/fp8 -> 32 (second-to-last dim tiling minimum).
    itemsize = jnp.dtype(dtype).itemsize
    return {4: 8, 2: 16, 1: 32}.get(itemsize, 8)


def _pick_tiles(M, K, N, x_dtype):
    sub_x = _sublane_min(x_dtype)
    if M <= 256:
        # Small-batch path: whole batch in one tile (padded to the sublane minimum),
        # cost is dominated by weight streaming.
        tm = _round_up(M, sub_x)
    else:
        tm = 256  # multiple of 8/16/32, fills the MXU rows
    # tn: 128-aligned (lane width), capped at 512 -> lane-dense unmasked stores.
    tn = min(_round_up(N, 128), 512)
    # tk: prefer a single reduction step when K fits (<= 1024); else 512 chunks.
    tk = _round_up(K, 128) if K <= 1024 else 512
    return tm, tn, tk


@functools.partial(jax.jit, static_argnames=("tm", "tn", "tk"))
def bridgeout_batch_fc_forward(x, weight, bias, *, tm=None, tn=None, tk=None):
    """y = x @ weight + bias   (eval-mode forward of BridgeoutBatchFcLayer).

    x:      (N, in_features)
    weight: (in_features, out_features)
    bias:   (out_features,) or None
    """
    M, K = x.shape
    Kw, N = weight.shape
    assert K == Kw, "weight must be (in_features, out_features)"
    if bias is None:
        bias = jnp.zeros((N,), dtype=x.dtype)
    assert bias.shape == (N,)

    a_tm, a_tn, a_tk = _pick_tiles(M, K, N, x.dtype)
    tm = a_tm if tm is None else tm
    tn = a_tn if tn is None else tn
    tk = a_tk if tk is None else tk

    # Pad every operand up to the tile grid with zeros (padded K rows/cols contribute 0).
    M_pad = _round_up(M, tm)
    K_pad = _round_up(K, tk)
    N_pad = _round_up(N, tn)

    if (M_pad, K_pad) != (M, K):
        x = jnp.pad(x, ((0, M_pad - M), (0, K_pad - K)))
    if (K_pad, N_pad) != (K, N):
        weight = jnp.pad(weight, ((0, K_pad - K), (0, N_pad - N)))
    bias2d = bias.reshape(1, N)
    if N_pad != N:
        bias2d = jnp.pad(bias2d, ((0, 0), (0, N_pad - N)))

    grid = (M_pad // tm, N_pad // tn, K_pad // tk)
    single_k = grid[2] == 1

    # VMEM budget: double-buffered x/W/bias tiles + double-buffered output (+ f32 acc).
    xb = jnp.dtype(x.dtype).itemsize
    wb = jnp.dtype(weight.dtype).itemsize
    bb = jnp.dtype(bias2d.dtype).itemsize
    ob = jnp.dtype(x.dtype).itemsize
    vmem_needed = (
        2 * (tm * tk * xb + tk * tn * wb + tn * bb)
        + 2 * tm * tn * ob
        + (0 if single_k else tm * tn * 4)
    )
    # Cap at 64 MiB so the limit is also valid on v7x (64 MiB physical VMEM per TC).
    vmem_limit = int(min(vmem_needed * 2 + (2 << 20), 64 << 20))

    cost = pl.CostEstimate(
        flops=2 * M * N * K,
        bytes_accessed=xb * M * K + wb * K * N + ob * M * N + bb * N,
        transcendentals=0,
    )

    kernel = _fc_bias_single_k_kernel if single_k else _fc_bias_multi_k_kernel
    scratch_shapes = [] if single_k else [pltpu.VMEM((tm, tn), jnp.float32)]

    out = pl.pallas_call(
        kernel,
        out_shape=jax.ShapeDtypeStruct((M_pad, N_pad), x.dtype),
        grid_spec=pltpu.PrefetchScalarGridSpec(
            num_scalar_prefetch=0,
            grid=grid,
            in_specs=[
                pl.BlockSpec((tm, tk), lambda i, j, k: (i, k)),   # x tile
                pl.BlockSpec((tk, tn), lambda i, j, k: (k, j)),   # weight tile
                pl.BlockSpec((1, tn), lambda i, j, k: (0, j)),    # bias tile
            ],
            out_specs=pl.BlockSpec((tm, tn), lambda i, j, k: (i, j)),
            scratch_shapes=scratch_shapes,
        ),
        compiler_params=pltpu.CompilerParams(
            dimension_semantics=("parallel", "parallel", "arbitrary"),
            vmem_limit_bytes=vmem_limit,
        ),
        cost_estimate=cost,
    )(x, weight, bias2d)

    if (M_pad, N_pad) != (M, N):
        out = out[:M, :N]
    return out


def init_params(key, in_features, out_features, dtype=jnp.float32):
    """Deterministic init mirroring reset_parameters(): U(-stdv, stdv), stdv = 1/sqrt(in)."""
    stdv = 1.0 / math.sqrt(in_features)
    kw, kb = jax.random.split(key)
    weight = jax.random.uniform(
        kw, (in_features, out_features), dtype=dtype, minval=-stdv, maxval=stdv
    )
    bias = jax.random.uniform(
        kb, (out_features,), dtype=dtype, minval=-stdv, maxval=stdv
    )
    return weight, bias


if __name__ == "__main__":
    key = jax.random.PRNGKey(0)
    k_x, k_p, k_x2, k_p2, k_x3, k_p3 = jax.random.split(key, 6)

    # Small demo shapes consistent with the module: (batch, in_features) -> (batch, out_features)
    batch = 8
    in_features = 256
    out_features = 128

    x = jax.random.normal(k_x, (batch, in_features), dtype=jnp.float32)
    weight, bias = init_params(k_p, in_features, out_features)

    y = bridgeout_batch_fc_forward(x, weight, bias)
    y = jax.block_until_ready(y)

    y_ref = x @ weight + bias
    assert y.shape == (batch, out_features)
    assert jnp.allclose(y, y_ref, atol=1e-4, rtol=1e-4)

    # Non-tile-aligned shapes exercise the padding path.
    b2, in2, out2 = 5, 200, 150
    x2 = jax.random.normal(k_x2, (b2, in2), dtype=jnp.float32)
    w2, bi2 = init_params(k_p2, in2, out2)
    y2 = jax.block_until_ready(bridgeout_batch_fc_forward(x2, w2, bi2))
    y2_ref = x2 @ w2 + bi2
    assert y2.shape == (b2, out2)
    assert jnp.allclose(y2, y2_ref, atol=1e-4, rtol=1e-4)

    # Larger K exercises the multi-K (accumulator) path.
    b3, in3, out3 = 16, 1536, 256
    x3 = jax.random.normal(k_x3, (b3, in3), dtype=jnp.float32)
    w3, bi3 = init_params(k_p3, in3, out3)
    y3 = jax.block_until_ready(bridgeout_batch_fc_forward(x3, w3, bi3))
    y3_ref = x3 @ w3 + bi3
    assert y3.shape == (b3, out3)
    assert jnp.allclose(y3, y3_ref, atol=1e-3, rtol=1e-4)

    print("KERNEL_OK")
</pallas_src>

<mosaic_0001>
module attributes {stable_mosaic.version = 11 : i64} {
  func.func @_fc_bias_single_k_kernel(%arg0: i32, %arg1: i32, %arg2: i32, %arg3: memref<8x256xf32, #tpu.memory_space<vmem>>, %arg4: memref<256x128xf32, #tpu.memory_space<vmem>>, %arg5: memref<1x128xf32, #tpu.memory_space<vmem>>, %arg6: memref<8x128xf32, #tpu.memory_space<vmem>>) attributes {dimension_semantics = [#tpu.dimension_semantics<parallel>, #tpu.dimension_semantics<parallel>, #tpu.dimension_semantics<arbitrary>], iteration_bounds = array<i64: 1, 1, 1>, scalar_prefetch = 0 : i64, scratch_operands = 0 : i64, tpu.core_type = #tpu.core_type<tc>, window_params = [{transform_indices = @transform_0, window_bounds = array<i64: 8, 256>}, {transform_indices = @transform_1, window_bounds = array<i64: 256, 128>}, {transform_indices = @transform_2, window_bounds = array<i64: 1, 128>}, {transform_indices = @transform_3, window_bounds = array<i64: 8, 128>}]} {
    %c0 = arith.constant 0 : index
    %c0_0 = arith.constant 0 : index
    %0 = vector.load %arg3[%c0, %c0_0] : memref<8x256xf32, #tpu.memory_space<vmem>>, vector<8x256xf32>
    %c0_1 = arith.constant 0 : index
    %c0_2 = arith.constant 0 : index
    %1 = vector.load %arg4[%c0_1, %c0_2] : memref<256x128xf32, #tpu.memory_space<vmem>>, vector<256x128xf32>
    %cst = arith.constant dense<0.000000e+00> : vector<8x128xf32>
    %2 = tpu.matmul %0, %1, %cst {dimension_numbers = #tpu.dot_dimension_numbers<[1], [0], [0], [1], [0, 0, 1, 1], [], []>} : vector<8x256xf32>, vector<256x128xf32>, vector<8x128xf32> -> vector<8x128xf32>
    %c0_3 = arith.constant 0 : index
    %c0_4 = arith.constant 0 : index
    %3 = vector.load %arg5[%c0_3, %c0_4] : memref<1x128xf32, #tpu.memory_space<vmem>>, vector<1x128xf32>
    %4 = vector.broadcast %3 : vector<1x128xf32> to vector<8x128xf32>
    %5 = arith.addf %2, %4 : vector<8x128xf32>
    %c0_5 = arith.constant 0 : index
    %c0_6 = arith.constant 0 : index
    %6 = vector.load %arg6[%c0_5, %c0_6] : memref<8x128xf32, #tpu.memory_space<vmem>>, vector<8x128xf32>
    tpu.vector_store %arg6[%c0_5, %c0_6], %5 {strides = array<i32>} : memref<8x128xf32, #tpu.memory_space<vmem>>, vector<8x128xf32>,
    return
  }
  func.func @transform_0(%arg0: i32, %arg1: i32, %arg2: i32) -> (i32, i32) {
    %c0_i32 = arith.constant 0 : i32
    return %arg0, %arg2 : i32, i32
  }
  func.func @transform_1(%arg0: i32, %arg1: i32, %arg2: i32) -> (i32, i32) {
    %c0_i32 = arith.constant 0 : i32
    return %arg2, %arg1 : i32, i32
  }
  func.func @transform_2(%arg0: i32, %arg1: i32, %arg2: i32) -> (i32, i32) {
    %c0_i32 = arith.constant 0 : i32
    %c0_i32_0 = arith.constant 0 : i32
    return %c0_i32, %arg1 : i32, i32
  }
  func.func @transform_3(%arg0: i32, %arg1: i32, %arg2: i32) -> (i32, i32) {
    %c0_i32 = arith.constant 0 : i32
    return %arg0, %arg1 : i32, i32
  }
}

</mosaic_0001>

<llo_original>
// kernel: bridgeout_batch_fc_forward.1
$region0: #{bridgeout_batch_fc_forward.1}
  #allocation0 [shape = 'u32[]', space=smem, size = 0x4, offset = 0x4, fixed_abs, tag = 'smem constant byte address 0x4 - core index']
  #allocation1 [shape = 'u32[144,128]{1,0:T(1,128)}', space=vmem, size = 0x12000, scoped, tag = 'internal scratch']
  %s0 = inlined_call_operand.hbm [shape: f32[8,256], index: 0, kind: input, shape index: {}]
  %s1 = inlined_call_operand.hbm [shape: f32[256,128], index: 1, kind: input, shape index: {}]
  %s2 = inlined_call_operand.vmem [shape: f32[1,128], index: 2, kind: input, shape index: {}]
  %s3 = inlined_call_operand.hbm [shape: f32[8,128], index: 3, kind: output, shape index: {}]
  %s4 = sld [smem:[#allocation0]]
  $region30: #{bridgeout_batch_fc_forward.1} parent=0
    _
  %s6 = ssub.s32 1, %s4
  %s7 = scalar_select 0, %s6, %s4
  $region1: #{bridgeout_batch_fc_forward.1} parent=0
    #allocation2 [shape = 'u8[8192]{0}', space=vmem, size = 0x2000, scoped, tag = 'input window, operand 0, single buffered']
    #allocation3 [shape = 's32[1]{0}', space=sflag, size = 0x4, scoped, tag = 'scoped memory for bridgeout_batch_fc_forward.1']
    #allocation4 [shape = 's32[1]{0}', space=sflag, size = 0x4, scoped, tag = 'scoped memory for bridgeout_batch_fc_forward.1']
    #allocation5 [shape = 'u8[131072]{0}', space=vmem, size = 0x20000, scoped, tag = 'input window, operand 1, single buffered']
    #allocation6 [shape = 's32[1]{0}', space=sflag, size = 0x4, scoped, tag = 'scoped memory for bridgeout_batch_fc_forward.1']
    #allocation7 [shape = 'u8[4096]{0}', space=vmem, size = 0x1000, scoped, tag = 'output window, operand 0, single buffered']
    %8 = vsyncpa [#allocation3], 0
    %9 = vsyncpa [#allocation6], 0
    %10 = vsyncpa [#allocation4], 0
    // Predicated region
    $region2: #{bridgeout_batch_fc_forward.1} parent=1 // pred_check
      _
    $region3: #{bridgeout_batch_fc_forward.1} parent=1 // pred_check_branch
      %12 = sbr.rel (0) target = $region5
    $region4: #{bridgeout_batch_fc_forward.1} parent=1 // pred_region
      %s14 = ssub.s32 256, 256
      %15 = vsyncadd [#allocation3], %s14
      %s17 = sshll.u32 [#allocation2], 4
      %s18 = int_to_ptr.vmem [resolvable:$true] %s17
      %20 = dma.hbm_to_vmem [thread:$0]  %s0, 256, %s18, [#allocation3]
    $region5: #{bridgeout_batch_fc_forward.1} parent=1 // pred_fallthru
      _
    // Predicated region
    $region6: #{bridgeout_batch_fc_forward.1} parent=1 // pred_check
      _
    $region7: #{bridgeout_batch_fc_forward.1} parent=1 // pred_check_branch
      %22 = sbr.rel (0) target = $region9
    $region8: #{bridgeout_batch_fc_forward.1} parent=1 // pred_region
      %s24 = ssub.s32 4096, 4096
      %25 = vsyncadd [#allocation6], %s24
      %s26 = sshll.u32 [#allocation5], 4
      %s27 = int_to_ptr.vmem [resolvable:$true] %s26
      %32 = dma.hbm_to_vmem [thread:$0]  %s1, 4096, %s27, [#allocation6], 128, 128, 8
    $region9: #{bridgeout_batch_fc_forward.1} parent=1 // pred_fallthru
      _
    // Predicated region
    $region10: #{bridgeout_batch_fc_forward.1} parent=1 // pred_check
      _
    $region11: #{bridgeout_batch_fc_forward.1} parent=1 // pred_check_branch
      %34 = sbr.rel (0) target = $region13
    $region12: #{bridgeout_batch_fc_forward.1} parent=1 // pred_region
      _
    $region13: #{bridgeout_batch_fc_forward.1} parent=1 // pred_fallthru
      _
    // Predicated region
    $region14: #{bridgeout_batch_fc_forward.1} parent=1 // pred_check
      _
    $region15: #{bridgeout_batch_fc_forward.1} parent=1 // pred_check_branch
      %36 = sbr.rel (0) target = $region17
    $region16: #{bridgeout_batch_fc_forward.1} parent=1 // pred_region
      %37 = dma.done [#allocation3], 256
    $region17: #{bridgeout_batch_fc_forward.1} parent=1 // pred_fallthru
      _
    // Predicated region
    $region18: #{bridgeout_batch_fc_forward.1} parent=1 // pred_check
      _
    $region19: #{bridgeout_batch_fc_forward.1} parent=1 // pred_check_branch
      %39 = sbr.rel (0) target = $region21
    $region20: #{bridgeout_batch_fc_forward.1} parent=1 // pred_region
      %40 = dma.done [#allocation6], 4096
    $region21: #{bridgeout_batch_fc_forward.1} parent=1 // pred_fallthru
      _
    %v41 = vld [vmem:[#allocation2] sm:$0xff]
    %v42 = vld [vmem:[#allocation2 + $0x8] sm:$0xff]
    %v43 = vld [vmem:[#allocation5] sm:$0xff]
    %v44 = vld [vmem:[#allocation5 + $0x8] sm:$0xff]
    %v45 = vld [vmem:[#allocation5 + $0x10] sm:$0xff]
    %v46 = vld [vmem:[#allocation5 + $0x18] sm:$0xff]
    %v47 = vld [vmem:[#allocation5 + $0x20] sm:$0xff]
    %v48 = vld [vmem:[#allocation5 + $0x28] sm:$0xff]
    %v49 = vld [vmem:[#allocation5 + $0x30] sm:$0xff]
    %v50 = vld [vmem:[#allocation5 + $0x38] sm:$0xff]
    %v51 = vld [vmem:[#allocation5 + $0x40] sm:$0xff]
    %v52 = vld [vmem:[#allocation5 + $0x48] sm:$0xff]
    %v53 = vld [vmem:[#allocation5 + $0x50] sm:$0xff]
    %v54 = vld [vmem:[#allocation5 + $0x58] sm:$0xff]
    %v55 = vld [vmem:[#allocation5 + $0x60] sm:$0xff]
    %v56 = vld [vmem:[#allocation5 + $0x68] sm:$0xff]
    %v57 = vld [vmem:[#allocation5 + $0x70] sm:$0xff]
    %v58 = vld [vmem:[#allocation5 + $0x78] sm:$0xff]
    %v59 = vld [vmem:[#allocation5 + $0x80] sm:$0xff]
    %v60 = vld [vmem:[#allocation5 + $0x88] sm:$0xff]
    %v61 = vld [vmem:[#allocation5 + $0x90] sm:$0xff]
    %v62 = vld [vmem:[#allocation5 + $0x98] sm:$0xff]
    %v63 = vld [vmem:[#allocation5 + $0xa0] sm:$0xff]
    %v64 = vld [vmem:[#allocation5 + $0xa8] sm:$0xff]
    %v65 = vld [vmem:[#allocation5 + $0xb0] sm:$0xff]
    %v66 = vld [vmem:[#allocation5 + $0xb8] sm:$0xff]
    %v67 = vld [vmem:[#allocation5 + $0xc0] sm:$0xff]
    %v68 = vld [vmem:[#allocation5 + $0xc8] sm:$0xff]
    %v69 = vld [vmem:[#allocation5 + $0xd0] sm:$0xff]
    %v70 = vld [vmem:[#allocation5 + $0xd8] sm:$0xff]
    %v71 = vld [vmem:[#allocation5 + $0xe0] sm:$0xff]
    %v72 = vld [vmem:[#allocation5 + $0xe8] sm:$0xff]
    %v73 = vld [vmem:[#allocation5 + $0xf0] sm:$0xff]
    %v74 = vld [vmem:[#allocation5 + $0xf8] sm:$0xff]
    %v75 = vld [vmem:[%s2] sm:$0x1]
    %v77 = vlaneseq
    %v78 = vshrl.u32 %v77, 7
    %v79 = vsub.s32 0, %v78
    %v80 = vrot.slane %v75, %v79
    %82 = vmatprep.subr.mxu0 0.0
    %83 = vmatpush1.msra.mxu0 %v58
    %84 = vmatprep.subr.mxu0 0.0
    %85 = vmatpush1.msra.mxu0 %v57
    %86 = vmatprep.subr.mxu0 0.0
    %87 = vmatpush1.msra.mxu0 %v56
    %88 = vmatprep.subr.mxu0 0.0
    %89 = vmatpush1.msra.mxu0 %v55
    %90 = vmatprep.subr.mxu0 0.0
    %91 = vmatpush1.msra.mxu0 %v54
    %92 = vmatprep.subr.mxu0 0.0
    %93 = vmatpush1.msra.mxu0 %v53
    %94 = vmatprep.subr.mxu0 0.0
    %95 = vmatpush1.msra.mxu0 %v52
    %96 = vmatprep.subr.mxu0 0.0
    %97 = vmatpush1.msra.mxu0 %v51
    %98 = vmatprep.subr.mxu0 0.0
    %99 = vmatpush1.msra.mxu0 %v50
    %100 = vmatprep.subr.mxu0 0.0
    %101 = vmatpush1.msra.mxu0 %v49
    %102 = vmatprep.subr.mxu0 0.0
    %103 = vmatpush1.msra.mxu0 %v48
    %104 = vmatprep.subr.mxu0 0.0
    %105 = vmatpush1.msra.mxu0 %v47
    %106 = vmatprep.subr.mxu0 0.0
    %107 = vmatpush1.msra.mxu0 %v46
    %108 = vmatprep.subr.mxu0 0.0
    %109 = vmatpush1.msra.mxu0 %v45
    %110 = vmatprep.subr.mxu0 0.0
    %111 = vmatpush1.msra.mxu0 %v44
    %112 = vmatprep.subr.mxu0 0.0
    %113 = vmatpush1.msra.mxu0 %v43
    %114 = vmatprep.subr.mxu0 0.0
    %115 = vmatpush2.msra.mxu0 %v74
    %116 = vmatprep.subr.mxu0 0.0
    %117 = vmatpush2.msra.mxu0 %v73
    %118 = vmatprep.subr.mxu0 0.0
    %119 = vmatpush2.msra.mxu0 %v72
    %120 = vmatprep.subr.mxu0 0.0
    %121 = vmatpush2.msra.mxu0 %v71
    %122 = vmatprep.subr.mxu0 0.0
    %123 = vmatpush2.msra.mxu0 %v70
    %124 = vmatprep.subr.mxu0 0.0
    %125 = vmatpush2.msra.mxu0 %v69
    %126 = vmatprep.subr.mxu0 0.0
    %127 = vmatpush2.msra.mxu0 %v68
    %128 = vmatprep.subr.mxu0 0.0
    %129 = vmatpush2.msra.mxu0 %v67
    %130 = vmatprep.subr.mxu0 0.0
    %131 = vmatpush2.msra.mxu0 %v66
    %132 = vmatprep.subr.mxu0 0.0
    %133 = vmatpush2.msra.mxu0 %v65
    %134 = vmatprep.subr.mxu0 0.0
    %135 = vmatpush2.msra.mxu0 %v64
    %136 = vmatprep.subr.mxu0 0.0
    %137 = vmatpush2.msra.mxu0 %v63
    %138 = vmatprep.subr.mxu0 0.0
    %139 = vmatpush2.msra.mxu0 %v62
    %140 = vmatprep.subr.mxu0 0.0
    %141 = vmatpush2.msra.mxu0 %v61
    %142 = vmatprep.subr.mxu0 0.0
    %143 = vmatpush2.msra.mxu0 %v60
    %144 = vmatprep.subr.mxu0 0.0
    %145 = vmatpush2.msra.mxu0 %v59
    %146 = vmatprep.mubr.f32.mxu0 %v42
    %147 = vmatmul.mubr.f32.gmra.mxu0 %v41
    %v148 = vpop.f32.mrf.mxu0
    %v149 = vadd.f32 %v80, %v148
    %v150 = vpop.f32.mrf.mxu0
    %151 = vdwg.mxu0
    %152 = vst [vmem:[#allocation7] sm:$0xff] %v149
    // Predicated region
    $region22: #{bridgeout_batch_fc_forward.1} parent=1 // pred_check
      _
    $region23: #{bridgeout_batch_fc_forward.1} parent=1 // pred_check_branch
      %154 = sbr.rel (0) target = $region25
    $region24: #{bridgeout_batch_fc_forward.1} parent=1 // pred_region
      %s156 = ssub.s32 128, 128
      %157 = vsyncadd [#allocation4], %s156
      %s159 = sshll.u32 [#allocation7], 4
      %s160 = int_to_ptr.vmem [resolvable:$true] %s159
      %162 = dma.vmem_to_hbm [thread:$0]  %s160, 128, %s3, [#allocation4]
    $region25: #{bridgeout_batch_fc_forward.1} parent=1 // pred_fallthru
      _
    // Predicated region
    $region26: #{bridgeout_batch_fc_forward.1} parent=1 // pred_check
      _
    $region27: #{bridgeout_batch_fc_forward.1} parent=1 // pred_check_branch
      %164 = sbr.rel (0) target = $region29
    $region28: #{bridgeout_batch_fc_forward.1} parent=1 // pred_region
      %165 = dma.done [#allocation4], 128
    $region29: #{bridgeout_batch_fc_forward.1} parent=1 // pred_fallthru
      _
    %166 = vsyncpa [#allocation3], 1
    %167 = vsyncpa [#allocation6], 1
    %168 = vsyncpa [#allocation4], 1

</llo_original>
